<compile_context>
chip_gen: v6e
topology: v6e:2x2x1
jax: 0.10.0
libtpu: 0.0.40
codegen_flags: <defaults>
</compile_context>

<pallas_src>
import functools

import jax
import jax.numpy as jnp
from jax import lax
from jax.experimental import pallas as pl
from jax.experimental.pallas import tpu as pltpu


_INV_SQRT2 = 0.7071067811865476


def _gelu(x):
    # erf form, matches torch.nn.GELU default.
    return 0.5 * x * (1.0 + lax.erf(x * jnp.float32(_INV_SQRT2)))


def _activation_qparams(x):
    """Per-tensor affine uint8 qparams from runtime min/max (dynamic quant)."""
    x_min = jnp.minimum(jnp.min(x), 0.0)          # range forced to include 0
    x_max = jnp.maximum(jnp.max(x), 0.0)
    rng = x_max - x_min
    scale = jnp.where(rng > 0.0, rng / 255.0, jnp.float32(1.0))
    inv_scale = 1.0 / scale
    zp = jnp.clip(jnp.round(-x_min * inv_scale), 0.0, 255.0)
    return inv_scale, zp, scale


# ----------------------------------------------------------------------------
# Pallas kernel: dynamically-quantized Linear (optionally fused GELU on input)
# ----------------------------------------------------------------------------
def _dyn_quant_linear_kernel(q_ref, x_ref, wq_ref, b_ref, cs_ref, o_ref, acc_ref,
                             *, apply_gelu):
    # q_ref  : SMEM (3,) f32 = [1/scale_x, zp, scale_x*scale_w]
    # x_ref  : (tm, tk) f32 activations
    # wq_ref : (tk, tn) int8 quantized weights (pre-transposed, (in, out))
    # b_ref  : (1, tn)  f32 bias
    # cs_ref : (1, tn)  f32 column sums of the full-K quantized weight
    # o_ref  : (tm, tn) f32 output tile
    # acc_ref: (tm, tn) f32 VMEM accumulator scratch
    k = pl.program_id(2)

    @pl.when(k == 0)
    def _():
        acc_ref[...] = jnp.zeros_like(acc_ref)

    x = x_ref[...]
    if apply_gelu:
        x = _gelu(x)

    inv_scale_x = q_ref[0]
    zp = q_ref[1]

    # dynamic per-tensor uint8 quantization of the activation tile
    x_q = jnp.clip(jnp.round(x * inv_scale_x) + zp, 0.0, 255.0)

    # integer GEMM on the bf16 MXU path: x_q in [0,255] and w_q in [-127,127]
    # are exact in bf16; products accumulate exactly in f32.
    acc_ref[...] += jnp.dot(x_q.astype(jnp.bfloat16),
                            wq_ref[...].astype(jnp.bfloat16),
                            preferred_element_type=jnp.float32)

    @pl.when(k == pl.num_programs(2) - 1)
    def _():
        combined = q_ref[2]   # scale_x * scale_w
        # zero-point correction folded into the finalize:
        #   (x_q - zp) @ Wq == acc - zp * colsum(Wq)
        o_ref[...] = (acc_ref[...] - zp * cs_ref[...]) * combined + b_ref[...]


def _pick_tile(dim, preferred, align):
    """Largest tile <= preferred that is a multiple of `align` and divides dim.
    Falls back to the full extent when the dim is not aligned (Pallas allows
    full-dim blocks regardless of alignment)."""
    if dim < align or dim % align != 0:
        return dim
    t = min(preferred, dim)
    t = (t // align) * align
    while dim % t != 0:
        t -= align
    return t


def dyn_quant_linear(x, w_q, bias, w_colsum, w_scale, *, apply_gelu=False,
                     tm=256, tn=512, tk=512):
    """x: (M, K) f32; w_q: (K, N) int8; bias: (N,) f32;
       w_colsum: (1, N) f32; w_scale: () f32."""
    M, K = x.shape
    Kw, N = w_q.shape
    assert Kw == K and bias.shape == (N,) and w_colsum.shape == (1, N)

    # dynamic activation qparams: hoisted, fused XLA reduction (GELU applied
    # first if this layer's input goes through GELU before quantization).
    inv_scale_x, zp, scale_x = _activation_qparams(_gelu(x) if apply_gelu else x)
    qparams = jnp.stack([inv_scale_x, zp, scale_x * w_scale]).astype(jnp.float32)

    tm = _pick_tile(M, tm, 8)
    tn = _pick_tile(N, tn, 128)
    tk = _pick_tile(K, tk, 128)
    grid = (M // tm, N // tn, K // tk)

    kernel = functools.partial(_dyn_quant_linear_kernel, apply_gelu=apply_gelu)
    return pl.pallas_call(
        kernel,
        out_shape=jax.ShapeDtypeStruct((M, N), jnp.float32),
        grid_spec=pltpu.PrefetchScalarGridSpec(
            num_scalar_prefetch=0,
            grid=grid,
            in_specs=[
                pl.BlockSpec(memory_space=pltpu.MemorySpace.SMEM),        # qparams
                pl.BlockSpec((tm, tk), lambda i, j, k: (i, k)),           # x
                pl.BlockSpec((tk, tn), lambda i, j, k: (k, j)),           # w_q int8
                pl.BlockSpec((1, tn), lambda i, j, k: (0, j)),            # bias
                pl.BlockSpec((1, tn), lambda i, j, k: (0, j)),            # colsum
            ],
            out_specs=pl.BlockSpec((tm, tn), lambda i, j, k: (i, j)),
            scratch_shapes=[pltpu.VMEM((tm, tn), jnp.float32)],
        ),
        compiler_params=pltpu.CompilerParams(
            dimension_semantics=("parallel", "parallel", "arbitrary"),
            vmem_limit_bytes=32 * 1024 * 1024,
        ),
    )(qparams, x, w_q, bias.reshape(1, N), w_colsum)


# ----------------------------------------------------------------------------
# "quantize_dynamic" on weights: per-tensor symmetric int8 (done once at init)
# ----------------------------------------------------------------------------
def quantize_weight(w):
    """w: (out, in) f32 -> (in, out) int8, (1, out) f32 column sums, () f32 scale."""
    scale = jnp.maximum(jnp.max(jnp.abs(w)), 1e-8) / 127.0
    w_q = jnp.clip(jnp.round(w / scale), -127.0, 127.0)
    w_q_t = w_q.T                                              # (in, out)
    colsum = jnp.sum(w_q_t, axis=0, keepdims=True).astype(jnp.float32)
    return w_q_t.astype(jnp.int8), colsum, scale.astype(jnp.float32)


# ----------------------------------------------------------------------------
# QuantizedSAM forward
# ----------------------------------------------------------------------------
class QuantizedSAMPallas:
    def __init__(self, key, channels, hidden):
        k1, k2, k3, k4 = jax.random.split(key, 4)
        # fp32 "pretrained" weights (PyTorch Linear convention: (out, in))
        w1 = jax.random.normal(k1, (hidden, channels), jnp.float32) * 0.1
        b1 = jax.random.normal(k2, (hidden,), jnp.float32) * 0.01
        w2 = jax.random.normal(k3, (hidden, hidden), jnp.float32) * 0.1
        b2 = jax.random.normal(k4, (hidden,), jnp.float32) * 0.01
        # dynamic quantization quantizes the weights eagerly at wrap time
        self.w1_q, self.w1_cs, self.w1_s = quantize_weight(w1)
        self.w2_q, self.w2_cs, self.w2_s = quantize_weight(w2)
        self.b1, self.b2 = b1, b2
        self.hidden = hidden

    def __call__(self, x_nchw):
        B, C, H, W = x_nchw.shape
        # layout: NCHW -> (B*H*W, C) token matrix (channels last)
        tokens = jnp.transpose(x_nchw, (0, 2, 3, 1)).reshape(B * H * W, C)
        h1 = dyn_quant_linear(tokens, self.w1_q, self.b1, self.w1_cs, self.w1_s,
                              apply_gelu=False)
        # TODO(synk): optional further fusion of layer1->GELU->layer2 per M-tile
        # (two-pass dynamic scale) to remove the h1 HBM round trip at real SAM sizes.
        h2 = dyn_quant_linear(h1, self.w2_q, self.b2, self.w2_cs, self.w2_s,
                              apply_gelu=True)   # GELU fused before 2nd quant
        return h2.reshape(B, H * W, self.hidden)


# ----------------------------------------------------------------------------
# Pure-JAX reference of the same quantization semantics (for verification)
# ----------------------------------------------------------------------------
def _ref_dyn_quant_linear(x, w_q_i8, bias, w_scale, apply_gelu):
    if apply_gelu:
        x = _gelu(x)
    inv_scale, zp, scale = _activation_qparams(x)
    x_q = jnp.clip(jnp.round(x * inv_scale) + zp, 0.0, 255.0)
    w = w_q_i8.astype(jnp.float32)
    return (x_q - zp) @ w * (scale * w_scale) + bias


def reference_forward(model, x_nchw):
    B, C, H, W = x_nchw.shape
    t = jnp.transpose(x_nchw, (0, 2, 3, 1)).reshape(B * H * W, C)
    h1 = _ref_dyn_quant_linear(t, model.w1_q, model.b1, model.w1_s, False)
    h2 = _ref_dyn_quant_linear(h1, model.w2_q, model.b2, model.w2_s, True)
    return h2.reshape(B, H * W, model.hidden)


if __name__ == "__main__":
    key = jax.random.PRNGKey(0)
    k_in, k_model = jax.random.split(key)

    B, C, H, W = 2, 4, 16, 16
    hidden = 32
    x = jax.random.normal(k_in, (B, C, H, W), jnp.float32)

    model = QuantizedSAMPallas(k_model, channels=C, hidden=hidden)

    out = model(x)
    out = jax.block_until_ready(out)

    ref = reference_forward(model, x)
    assert out.shape == (B, H * W, hidden)
    assert jnp.allclose(out, ref, rtol=1e-5, atol=1e-5), "mismatch vs reference"

    print("KERNEL_OK")
</pallas_src>

<mosaic_0001>
module attributes {stable_mosaic.version = 11 : i64} {
  func.func @_dyn_quant_linear_kernel(%arg0: i32, %arg1: i32, %arg2: i32, %arg3: memref<3xf32, #tpu.memory_space<smem>>, %arg4: memref<256x4xf32, #tpu.memory_space<vmem>>, %arg5: memref<4x32xi8, #tpu.memory_space<vmem>>, %arg6: memref<1x32xf32, #tpu.memory_space<vmem>>, %arg7: memref<1x32xf32, #tpu.memory_space<vmem>>, %arg8: memref<256x32xf32, #tpu.memory_space<vmem>>, %arg9: memref<256x32xf32, #tpu.memory_space<vmem>>) attributes {dimension_semantics = [#tpu.dimension_semantics<parallel>, #tpu.dimension_semantics<parallel>, #tpu.dimension_semantics<arbitrary>], iteration_bounds = array<i64: 2, 1, 1>, scalar_prefetch = 0 : i64, scratch_operands = 1 : i64, tpu.core_type = #tpu.core_type<tc>, window_params = [{transform_indices = @transform_0, window_bounds = array<i64: 3>}, {transform_indices = @transform_1, window_bounds = array<i64: 256, 4>}, {transform_indices = @transform_2, window_bounds = array<i64: 4, 32>}, {transform_indices = @transform_3, window_bounds = array<i64: 1, 32>}, {transform_indices = @transform_4, window_bounds = array<i64: 1, 32>}, {transform_indices = @transform_5, window_bounds = array<i64: 256, 32>}]} {
    %c0_i32 = arith.constant 0 : i32
    %0 = arith.cmpi eq, %arg2, %c0_i32 : i32
    %1 = arith.extui %0 : i1 to i32
    %c0_i32_0 = arith.constant 0 : i32
    %2 = arith.cmpi ne, %1, %c0_i32_0 : i32
    scf.if %2 {
      %cst_13 = arith.constant 0.000000e+00 : f32
      %25 = vector.broadcast %cst_13 : f32 to vector<256x32xf32>
      %c0_14 = arith.constant 0 : index
      %c0_15 = arith.constant 0 : index
      %26 = vector.load %arg9[%c0_14, %c0_15] : memref<256x32xf32, #tpu.memory_space<vmem>>, vector<256x32xf32>
      tpu.vector_store %arg9[%c0_14, %c0_15], %25 {strides = array<i32>} : memref<256x32xf32, #tpu.memory_space<vmem>>, vector<256x32xf32>,
    } else {
    }
    %c0 = arith.constant 0 : index
    %c0_1 = arith.constant 0 : index
    %3 = vector.load %arg4[%c0, %c0_1] : memref<256x4xf32, #tpu.memory_space<vmem>>, vector<256x4xf32>
    %c0_2 = arith.constant 0 : index
    %4 = memref.load %arg3[%c0_2] : memref<3xf32, #tpu.memory_space<smem>>
    %c1 = arith.constant 1 : index
    %5 = memref.load %arg3[%c1] : memref<3xf32, #tpu.memory_space<smem>>
    %6 = vector.broadcast %4 : f32 to vector<256x4xf32>
    %7 = arith.mulf %3, %6 : vector<256x4xf32>
    %8 = math.roundeven %7 : vector<256x4xf32>
    %9 = vector.broadcast %5 : f32 to vector<256x4xf32>
    %10 = arith.addf %8, %9 : vector<256x4xf32>
    %cst = arith.constant 0.000000e+00 : f32
    %cst_3 = arith.constant 2.550000e+02 : f32
    %11 = vector.broadcast %cst : f32 to vector<256x4xf32>
    %12 = arith.maximumf %11, %10 : vector<256x4xf32>
    %13 = vector.broadcast %cst_3 : f32 to vector<256x4xf32>
    %14 = arith.minimumf %13, %12 : vector<256x4xf32>
    %c0_4 = arith.constant 0 : index
    %c0_5 = arith.constant 0 : index
    %15 = vector.load %arg9[%c0_4, %c0_5] : memref<256x32xf32, #tpu.memory_space<vmem>>, vector<256x32xf32>
    %16 = arith.truncf %14 : vector<256x4xf32> to vector<256x4xbf16>
    %c0_6 = arith.constant 0 : index
    %c0_7 = arith.constant 0 : index
    %17 = vector.load %arg5[%c0_6, %c0_7] : memref<4x32xi8, #tpu.memory_space<vmem>>, vector<4x32xi8>
    %18 = arith.sitofp %17 : vector<4x32xi8> to vector<4x32xbf16>
    %cst_8 = arith.constant dense<0.000000e+00> : vector<256x32xf32>
    %19 = tpu.matmul %16, %18, %cst_8 {dimension_numbers = #tpu.dot_dimension_numbers<[1], [0], [0], [1], [0, 0, 1, 1], [], []>} : vector<256x4xbf16>, vector<4x32xbf16>, vector<256x32xf32> -> vector<256x32xf32>
    %20 = arith.addf %15, %19 : vector<256x32xf32>
    %c0_9 = arith.constant 0 : index
    %c0_10 = arith.constant 0 : index
    %21 = vector.load %arg9[%c0_9, %c0_10] : memref<256x32xf32, #tpu.memory_space<vmem>>, vector<256x32xf32>
    tpu.vector_store %arg9[%c0_9, %c0_10], %20 {strides = array<i32>} : memref<256x32xf32, #tpu.memory_space<vmem>>, vector<256x32xf32>,
    %c0_i32_11 = arith.constant 0 : i32
    %22 = arith.cmpi eq, %arg2, %c0_i32_11 : i32
    %23 = arith.extui %22 : i1 to i32
    %c0_i32_12 = arith.constant 0 : i32
    %24 = arith.cmpi ne, %23, %c0_i32_12 : i32
    scf.if %24 {
      %c2 = arith.constant 2 : index
      %25 = memref.load %arg3[%c2] : memref<3xf32, #tpu.memory_space<smem>>
      %c0_13 = arith.constant 0 : index
      %c0_14 = arith.constant 0 : index
      %26 = vector.load %arg9[%c0_13, %c0_14] : memref<256x32xf32, #tpu.memory_space<vmem>>, vector<256x32xf32>
      %c0_15 = arith.constant 0 : index
      %c0_16 = arith.constant 0 : index
      %27 = vector.load %arg7[%c0_15, %c0_16] : memref<1x32xf32, #tpu.memory_space<vmem>>, vector<1x32xf32>
      %28 = vector.broadcast %5 : f32 to vector<1x32xf32>
      %29 = arith.mulf %28, %27 : vector<1x32xf32>
      %30 = vector.broadcast %29 : vector<1x32xf32> to vector<256x32xf32>
      %31 = arith.subf %26, %30 : vector<256x32xf32>
      %32 = vector.broadcast %25 : f32 to vector<256x32xf32>
      %33 = arith.mulf %31, %32 : vector<256x32xf32>
      %c0_17 = arith.constant 0 : index
      %c0_18 = arith.constant 0 : index
      %34 = vector.load %arg6[%c0_17, %c0_18] : memref<1x32xf32, #tpu.memory_space<vmem>>, vector<1x32xf32>
      %35 = vector.broadcast %34 : vector<1x32xf32> to vector<256x32xf32>
      %36 = arith.addf %33, %35 : vector<256x32xf32>
      %c0_19 = arith.constant 0 : index
      %c0_20 = arith.constant 0 : index
      %37 = vector.load %arg8[%c0_19, %c0_20] : memref<256x32xf32, #tpu.memory_space<vmem>>, vector<256x32xf32>
      tpu.vector_store %arg8[%c0_19, %c0_20], %36 {strides = array<i32>} : memref<256x32xf32, #tpu.memory_space<vmem>>, vector<256x32xf32>,
    } else {
    }
    return
  }
  func.func @transform_0(%arg0: i32, %arg1: i32, %arg2: i32) -> i32 {
    %c0_i32 = arith.constant 0 : i32
    %c0_i32_0 = arith.constant 0 : i32
    return %c0_i32 : i32
  }
  func.func @transform_1(%arg0: i32, %arg1: i32, %arg2: i32) -> (i32, i32) {
    %c0_i32 = arith.constant 0 : i32
    return %arg0, %arg2 : i32, i32
  }
  func.func @transform_2(%arg0: i32, %arg1: i32, %arg2: i32) -> (i32, i32) {
    %c0_i32 = arith.constant 0 : i32
    return %arg2, %arg1 : i32, i32
  }
  func.func @transform_3(%arg0: i32, %arg1: i32, %arg2: i32) -> (i32, i32) {
    %c0_i32 = arith.constant 0 : i32
    %c0_i32_0 = arith.constant 0 : i32
    return %c0_i32, %arg1 : i32, i32
  }
  func.func @transform_4(%arg0: i32, %arg1: i32, %arg2: i32) -> (i32, i32) {
    %c0_i32 = arith.constant 0 : i32
    %c0_i32_0 = arith.constant 0 : i32
    return %c0_i32, %arg1 : i32, i32
  }
  func.func @transform_5(%arg0: i32, %arg1: i32, %arg2: i32) -> (i32, i32) {
    %c0_i32 = arith.constant 0 : i32
    return %arg0, %arg1 : i32, i32
  }
}

</mosaic_0001>

<llo_original>
// kernel: tpu_custom_call.1
$region0: #{tpu_custom_call.1}
  #allocation0 [shape = 'u32[]', space=smem, size = 0x4, offset = 0x4, fixed_abs, tag = 'smem constant byte address 0x4 - core index']
  #allocation1 [shape = 'u32[144,128]{1,0:T(1,128)}', space=vmem, size = 0x12000, scoped, tag = 'internal scratch']
  #allocation2 [shape = 'f32[256,32]{1,0:T(8,128)}', space=vmem, size = 0x20000, scoped, tag = 'scratch operand']
  %s0 = inlined_call_operand.vmem [shape: f32[3], index: 0, kind: input, shape index: {}]
  %s1 = inlined_call_operand.vmem [shape: f32[512,4], index: 1, kind: input, shape index: {}]
  %s2 = inlined_call_operand.vmem [shape: s8[4,32], index: 2, kind: input, shape index: {}]
  %s3 = inlined_call_operand.vmem [shape: f32[1,32], index: 3, kind: input, shape index: {}]
  %s4 = inlined_call_operand.vmem [shape: f32[1,32], index: 4, kind: input, shape index: {}]
  %s5 = inlined_call_operand.vmem [shape: f32[512,32], index: 5, kind: output, shape index: {}]
  %s6 = sld [smem:[#allocation0]]
  $region65: #{tpu_custom_call.1} parent=0
    _
  %s8 = ssub.s32 1, %s6
  %s9 = scalar_select 0, %s8, %s6
  $region1: #{tpu_custom_call.1} parent=0
    #allocation3 [shape = 'u8[512]{0}', space=smem, size = 0x200, scoped, tag = 'input window, operand 0, single buffered']
    #allocation4 [shape = 's32[2]{0}', space=sflag, size = 0x8, scoped, tag = 'scoped memory for tpu_custom_call.1']
    %10 = vsyncpa [#allocation4], 0
    loop: start=0, step=1, limit=4
    $region2: #{tpu_custom_call.1} parent=1 // loop_pre_header
      _
    $region3: #{tpu_custom_call.1} parent=1 // loop_header
      %s12 = sphi 0, %s16
      %p13 = scmp.ge.s32.totalorder %s12, 4
      %s19 = sphi 0, %s38
      %s20 = sphi 0, %s34
      %s21 = sphi 0, %s30
      %s22 = sphi 0, %s19
      %s23 = sphi 0, %s20
      %s24 = sphi 0, %s21
      %s25 = sphi 0, %s22
      %s26 = sphi 0, %s23
      %s27 = sphi 0, %s24
      %s39 = sphi 0, %s39
      %s41 = sphi 0, %s39
      %s42 = sphi 0, %s41
      %s56 = sphi 0, %s42
      %s64 = sphi 0, %s66
      %s67 = sphi 0, %s64
      %s68 = sphi 0, %s67
      %s84 = sphi 0, %s68
      %s92 = sphi 0, %s94
      %s95 = sphi 0, %s92
      %s96 = sphi 0, %s95
      %s112 = sphi 0, %s96
      %s118 = sphi 0, %s120
      %s121 = sphi 0, %s118
      %s122 = sphi 0, %s121
      %s138 = sphi 0, %s122
      %s144 = sphi 0, %s146
      %s147 = sphi 0, %s144
      %s148 = sphi 0, %s147
      %s164 = sphi 0, %s148
      %s172 = sphi 0, %s174
      %s175 = sphi 0, %s172
      %s176 = sphi 0, %s175
      %s192 = sphi 0, %s176
    $region4: #{tpu_custom_call.1} parent=1 // loop_header_branch
      %15 = sbr.rel (%p13) target = $region8
    $region5: #{tpu_custom_call.1} parent=1 // loop_body
      %s17 = ssub.s32 %s12, 1
      %s18 = ssub.s32 %s12, 2
      %s28 = sadd.s32 1, %s21
      %p29 = scmp.ge.s32.totalorder %s28, 1
      %s30 = scalar_select %p29, 0, %s28
      %s31 = sadd.s32 1, %s20
      %s32 = scalar_select %p29, %s31, %s20
      %p33 = scmp.ge.s32.totalorder %s32, 1
      %s34 = scalar_select %p33, 0, %s32
      %s35 = sadd.s32 1, %s19
      %s36 = scalar_select %p33, %s35, %s19
      %p37 = scmp.ge.s32.totalorder %s36, 2
      %s38 = scalar_select %p37, 0, %s36
      %s40 = sadd.s32 %s39, 1
      %p43 = scmp.eq.s32.totalorder %s12, 1
      %p44 = scmp.ne.s32.totalorder %s39, %s41
      %p45 = scmp.eq.s32.totalorder %s12, 0
      %p46 = por %p44, %p45
      %p47 = scmp.ne.s32.totalorder %s39, %s41
      %p48 = scmp.eq.s32.totalorder %s17, 1
      %p49 = por %p47, %p48
      %p50 = scmp.ne.s32.totalorder %s41, %s42
      %p51 = scmp.eq.s32.totalorder %s17, 0
      %p52 = por %p50, %p51
      %p53 = scmp.ne.s32.totalorder %s41, %s42
      %p54 = scmp.eq.s32.totalorder %s18, 1
      %p55 = por %p53, %p54
      %p57 = scmp.ne.s32.totalorder %s42, %s56
      %p58 = scmp.eq.s32.totalorder %s18, 0
      %p59 = por %p57, %p58
      %s60 = ssub.s32 %s19, %s38
      %s61 = ssub.s32 %s21, %s30
      %s62 = sor.u32 %s60, %s61
      %p63 = scmp.eq.s32.totalorder %s62, 0
      %s65 = sadd.s32 %s64, 1
      %s66 = scalar_select %p63, %s64, %s65
      %p69 = pneg %p63
      %p70 = scmp.eq.s32.totalorder %s12, 1
      %p71 = por %p69, %p70
      %p72 = scmp.ne.s32.totalorder %s64, %s67
      %p73 = scmp.eq.s32.totalorder %s12, 0
      %p74 = por %p72, %p73
      %p75 = scmp.ne.s32.totalorder %s64, %s67
      %p76 = scmp.eq.s32.totalorder %s17, 1
      %p77 = por %p75, %p76
      %p78 = scmp.ne.s32.totalorder %s67, %s68
      %p79 = scmp.eq.s32.totalorder %s17, 0
      %p80 = por %p78, %p79
      %p81 = scmp.ne.s32.totalorder %s67, %s68
      %p82 = scmp.eq.s32.totalorder %s18, 1
      %p83 = por %p81, %p82
      %p85 = scmp.ne.s32.totalorder %s68, %s84
      %p86 = scmp.eq.s32.totalorder %s18, 0
      %p87 = por %p85, %p86
      %s88 = ssub.s32 %s21, %s30
      %s89 = ssub.s32 %s20, %s34
      %s90 = sor.u32 %s88, %s89
      %p91 = scmp.eq.s32.totalorder %s90, 0
      %s93 = sadd.s32 %s92, 1
      %s94 = scalar_select %p91, %s92, %s93
      %p97 = pneg %p91
      %p98 = scmp.eq.s32.totalorder %s12, 1
      %p99 = por %p97, %p98
      %p100 = scmp.ne.s32.totalorder %s92, %s95
      %p101 = scmp.eq.s32.totalorder %s12, 0
      %p102 = por %p100, %p101
      %p103 = scmp.ne.s32.totalorder %s92, %s95
      %p104 = scmp.eq.s32.totalorder %s17, 1
      %p105 = por %p103, %p104
      %p106 = scmp.ne.s32.totalorder %s95, %s96
      %p107 = scmp.eq.s32.totalorder %s17, 0
      %p108 = por %p106, %p107
      %p109 = scmp.ne.s32.totalorder %s95, %s96
      %p110 = scmp.eq.s32.totalorder %s18, 1
      %p111 = por %p109, %p110
      %p113 = scmp.ne.s32.totalorder %s96, %s112
      %p114 = scmp.eq.s32.totalorder %s18, 0
      %p115 = por %p113, %p114
      %s116 = ssub.s32 %s20, %s34
      %p117 = scmp.eq.s32.totalorder %s116, 0
      %s119 = sadd.s32 %s118, 1
      %s120 = scalar_select %p117, %s118, %s119
      %p123 = pneg %p117
      %p124 = scmp.eq.s32.totalorder %s12, 1
      %p125 = por %p123, %p124
      %p126 = scmp.ne.s32.totalorder %s118, %s121
      %p127 = scmp.eq.s32.totalorder %s12, 0
      %p128 = por %p126, %p127
      %p129 = scmp.ne.s32.totalorder %s118, %s121
      %p130 = scmp.eq.s32.totalorder %s17, 1
      %p131 = por %p129, %p130
      %p132 = scmp.ne.s32.totalorder %s121, %s122
      %p133 = scmp.eq.s32.totalorder %s17, 0
      %p134 = por %p132, %p133
      %p135 = scmp.ne.s32.totalorder %s121, %s122
      %p136 = scmp.eq.s32.totalorder %s18, 1
      %p137 = por %p135, %p136
      %p139 = scmp.ne.s32.totalorder %s122, %s138
      %p140 = scmp.eq.s32.totalorder %s18, 0
      %p141 = por %p139, %p140
      %s142 = ssub.s32 %s20, %s34
      %p143 = scmp.eq.s32.totalorder %s142, 0
      %s145 = sadd.s32 %s144, 1
      %s146 = scalar_select %p143, %s144, %s145
      %p149 = pneg %p143
      %p150 = scmp.eq.s32.totalorder %s12, 1
      %p151 = por %p149, %p150
      %p152 = scmp.ne.s32.totalorder %s144, %s147
      %p153 = scmp.eq.s32.totalorder %s12, 0
      %p154 = por %p152, %p153
      %p155 = scmp.ne.s32.totalorder %s144, %s147
      %p156 = scmp.eq.s32.totalorder %s17, 1
      %p157 = por %p155, %p156
      %p158 = scmp.ne.s32.totalorder %s147, %s148
      %p159 = scmp.eq.s32.totalorder %s17, 0
      %p160 = por %p158, %p159
      %p161 = scmp.ne.s32.totalorder %s147, %s148
      %p162 = scmp.eq.s32.totalorder %s18, 1
      %p163 = por %p161, %p162
      %p165 = scmp.ne.s32.totalorder %s148, %s164
      %p166 = scmp.eq.s32.totalorder %s18, 0
      %p167 = por %p165, %p166
      %s168 = ssub.s32 %s19, %s38
      %s169 = ssub.s32 %s20, %s34
      %s170 = sor.u32 %s168, %s169
      %p171 = scmp.eq.s32.totalorder %s170, 0
      %s173 = sadd.s32 %s172, 1
      %s174 = scalar_select %p171, %s172, %s173
      %p177 = pneg %p171
      %p178 = scmp.eq.s32.totalorder %s12, 1
      %p179 = por %p177, %p178
      %p180 = scmp.ne.s32.totalorder %s172, %s175
      %p181 = scmp.eq.s32.totalorder %s12, 0
      %p182 = por %p180, %p181
      %p183 = scmp.ne.s32.totalorder %s172, %s175
      %p184 = scmp.eq.s32.totalorder %s17, 1
      %p185 = por %p183, %p184
      %p186 = scmp.ne.s32.totalorder %s175, %s176
      %p187 = scmp.eq.s32.totalorder %s17, 0
      %p188 = por %p186, %p187
      %p189 = scmp.ne.s32.totalorder %s175, %s176
      %p190 = scmp.eq.s32.totalorder %s18, 1
      %p191 = por %p189, %p190
      %p193 = scmp.ne.s32.totalorder %s176, %s192
      %p194 = scmp.eq.s32.totalorder %s18, 0
      %p195 = por %p193, %p194
      %p196 = scmp.le.s32.totalorder 1, %s12
      %p197 = scmp.lt.s32.totalorder %s12, 3
      %p198 = pnand %p196, %p197
      %p199 = pneg %p198
      // Predicated region
      $region9: #{tpu_custom_call.1} parent=5 // pred_check
        _
      $region10: #{tpu_custom_call.1} parent=5 // pred_check_branch
        %201 = sbr.rel (%p198) target = $region12
      $region11: #{tpu_custom_call.1} parent=5 // pred_region
        %s202 = ssub.s32 %s12, 1
        // Predicated region
        $region13: #{tpu_custom_call.1} parent=11 // pred_check
          %p203 = pneg %p52
        $region14: #{tpu_custom_call.1} parent=11 // pred_check_branch
          %205 = sbr.rel (%p203) target = $region16
        $region15: #{tpu_custom_call.1} parent=11 // pred_region
          %s207 = ssub.s32 16, 16
          %208 = vsyncadd [#allocation4], %s207
          %s210 = sshll.u32 %s0, 4
          %s211 = int_to_ptr.vmem [resolvable:$true] %s210
          %213 = dma.vmem_to_smem %s211, 16, [#allocation3], [#allocation4]
        $region16: #{tpu_custom_call.1} parent=11 // pred_fallthru
          _
        // Predicated region
        $region17: #{tpu_custom_call.1} parent=11 // pred_check
          %p214 = pneg %p108
        $region18: #{tpu_custom_call.1} parent=11 // pred_check_branch
          %216 = sbr.rel (%p214) target = $region20
        $region19: #{tpu_custom_call.1} parent=11 // pred_region
          %p217 = scmp.lt.s32.totalorder %s24, 0
          %s218 = scalar_select %p217, %s24, 0
          %p219 = scmp.lt.s32.totalorder %s23, 0
          %s220 = scalar_select %p219, %s23, 0
          %s221 = sadd.s32 %s220, %s218
          %s222 = scalar_lea.vmem %s2, %s221
        $region20: #{tpu_custom_call.1} parent=11 // pred_fallthru
          _
        // Predicated region
        $region21: #{tpu_custom_call.1} parent=11 // pred_check
          %p223 = pneg %p134
        $region22: #{tpu_custom_call.1} parent=11 // pred_check_branch
          %225 = sbr.rel (%p223) target = $region24
        $region23: #{tpu_custom_call.1} parent=11 // pred_region
          %p226 = scmp.lt.s32.totalorder %s23, 0
          %s227 = scalar_select %p226, %s23, 0
          %s228 = scalar_lea.vmem %s3, %s227
        $region24: #{tpu_custom_call.1} parent=11 // pred_fallthru
          _
        // Predicated region
        $region25: #{tpu_custom_call.1} parent=11 // pred_check
          %p229 = pneg %p160
        $region26: #{tpu_custom_call.1} parent=11 // pred_check_branch
          %231 = sbr.rel (%p229) target = $region28
        $region27: #{tpu_custom_call.1} parent=11 // pred_region
          %p232 = scmp.lt.s32.totalorder %s23, 0
          %s233 = scalar_select %p232, %s23, 0
          %s234 = scalar_lea.vmem %s4, %s233
        $region28: #{tpu_custom_call.1} parent=11 // pred_fallthru
          _
      $region12: #{tpu_custom_call.1} parent=5 // pred_fallthru
        _
      %p235 = scmp.lt.s32.totalorder %s12, 2
      // Predicated region
      $region29: #{tpu_custom_call.1} parent=5 // pred_check
        %p236 = pneg %p235
      $region30: #{tpu_custom_call.1} parent=5 // pred_check_branch
        %238 = sbr.rel (%p236) target = $region32
      $region31: #{tpu_custom_call.1} parent=5 // pred_region
        // Predicated region
        $region33: #{tpu_custom_call.1} parent=31 // pred_check
          %p239 = pneg %p74
        $region34: #{tpu_custom_call.1} parent=31 // pred_check_branch
          %241 = sbr.rel (%p239) target = $region36
        $region35: #{tpu_custom_call.1} parent=31 // pred_region
          %s242 = smul.u32 32, %s19
          %p243 = scmp.lt.s32.totalorder %s242, 63
          %s244 = scalar_select %p243, %s242, 63
          %p245 = scmp.lt.s32.totalorder %s21, 0
          %s246 = scalar_select %p245, %s21, 0
          %s247 = sadd.s32 %s246, %s244
          %s248 = smul.addr %s247, 8
          %s249 = scalar_lea.vmem %s1, %s248
          %s250 = smul.u32 32, %s19
        $region36: #{tpu_custom_call.1} parent=31 // pred_fallthru
          _
      $region32: #{tpu_custom_call.1} parent=5 // pred_fallthru
        _
      %p251 = scmp.le.s32.totalorder 1, %s12
      %p252 = scmp.lt.s32.totalorder %s12, 3
      %p253 = pnand %p251, %p252
      %p254 = pneg %p253
      // Predicated region
      $region37: #{tpu_custom_call.1} parent=5 // pred_check
        _
      $region38: #{tpu_custom_call.1} parent=5 // pred_check_branch
        %256 = sbr.rel (%p253) target = $region40
      $region39: #{tpu_custom_call.1} parent=5 // pred_region
        %s257 = ssub.s32 %s12, 1
        // Predicated region
        $region41: #{tpu_custom_call.1} parent=39 // pred_check
          %p258 = pneg %p52
        $region42: #{tpu_custom_call.1} parent=39 // pred_check_branch
          %260 = sbr.rel (%p258) target = $region44
        $region43: #{tpu_custom_call.1} parent=39 // pred_region
          %261 = dma.done [#allocation4], 16
        $region44: #{tpu_custom_call.1} parent=39 // pred_fallthru
          _
        %262 = sfence
        %p263 = pneg %p52
        %p264 = pneg %p49
        %s265 = smul.u32 32, %s22
        %p266 = scmp.lt.s32.totalorder %s265, 63
        %s267 = scalar_select %p266, %s265, 63
        %p268 = scmp.lt.s32.totalorder %s24, 0
        %s269 = scalar_select %p268, %s24, 0
        %s270 = sadd.s32 %s269, %s267
        %s271 = smul.addr %s270, 8
        %s272 = scalar_lea.vmem %s1, %s271
        %p273 = pneg %p80
        %p274 = pneg %p77
        %p275 = scmp.lt.s32.totalorder %s24, 0
        %s276 = scalar_select %p275, %s24, 0
        %p277 = scmp.lt.s32.totalorder %s23, 0
        %s278 = scalar_select %p277, %s23, 0
        %s279 = sadd.s32 %s278, %s276
        %s280 = scalar_lea.vmem %s2, %s279
        %p281 = pneg %p108
        %p282 = pneg %p105
        %p283 = scmp.lt.s32.totalorder %s23, 0
        %s284 = scalar_select %p283, %s23, 0
        %s285 = scalar_lea.vmem %s3, %s284
        %p286 = pneg %p134
        %p287 = pneg %p131
        %p288 = scmp.lt.s32.totalorder %s23, 0
        %s289 = scalar_select %p288, %s23, 0
        %s290 = scalar_lea.vmem %s4, %s289
        %p291 = pneg %p160
        %p292 = pneg %p157
        %p293 = pneg %p188
        %p294 = pneg %p185
        %s295 = smul.u32 32, %s22
        %p296 = scmp.lt.s32.totalorder %s295, 63
        %s297 = scalar_select %p296, %s295, 63
        %p298 = scmp.lt.s32.totalorder %s23, 0
        %s299 = scalar_select %p298, %s23, 0
        %s300 = sadd.s32 %s299, %s297
        %s301 = smul.addr %s300, 8
        %s302 = scalar_lea.vmem %s5, %s301
        %s303 = smul.u32 32, %s22
        %p304 = scmp.lt.s32.totalorder %s303, 63
        %s305 = scalar_select %p304, %s303, 63
        %p306 = scmp.lt.s32.totalorder %s24, 0
        %s307 = scalar_select %p306, %s24, 0
        %s308 = sadd.s32 %s307, %s305
        %s309 = smul.addr %s308, 8
        %s310 = scalar_lea.vmem %s1, %s309
        %s311 = smul.u32 32, %s22
        %p312 = scmp.lt.s32.totalorder %s24, 0
        %s313 = scalar_select %p312, %s24, 0
        %p314 = scmp.lt.s32.totalorder %s23, 0
        %s315 = scalar_select %p314, %s23, 0
        %s316 = sadd.s32 %s315, %s313
        %s317 = scalar_lea.vmem %s2, %s316
        %p318 = scmp.lt.s32.totalorder %s23, 0
        %s319 = scalar_select %p318, %s23, 0
        %s320 = scalar_lea.vmem %s3, %s319
        %p321 = scmp.lt.s32.totalorder %s23, 0
        %s322 = scalar_select %p321, %s23, 0
        %s323 = scalar_lea.vmem %s4, %s322
        %s324 = smul.u32 32, %s22
        %p325 = scmp.lt.s32.totalorder %s324, 63
        %s326 = scalar_select %p325, %s324, 63
        %p327 = scmp.lt.s32.totalorder %s23, 0
        %s328 = scalar_select %p327, %s23, 0
        %s329 = sadd.s32 %s328, %s326
        %s330 = smul.addr %s329, 8
        %s331 = scalar_lea.vmem %s5, %s330
        %s332 = smul.u32 32, %s22
        %p334 = scmp.eq.s32.totalorder %s24, 0
        // Predicated region
        $region45: #{tpu_custom_call.1} parent=39 // pred_check
          %p335 = pneg %p334
        $region46: #{tpu_custom_call.1} parent=39 // pred_check_branch
          %337 = sbr.rel (%p335) target = $region48
        $region47: #{tpu_custom_call.1} parent=39 // pred_region
          %vm338 = vcmask 261120
          %339 = vst.msk [vmem:[#allocation2] sm:$0xff] %vm338, 0.0
          %340 = vst.msk [vmem:[#allocation2 + $0x8] sm:$0xff] %vm338, 0.0
          %341 = vst.msk [vmem:[#allocation2 + $0x10] sm:$0xff] %vm338, 0.0
          %342 = vst.msk [vmem:[#allocation2 + $0x18] sm:$0xff] %vm338, 0.0
          %343 = vst.msk [vmem:[#allocation2 + $0x20] sm:$0xff] %vm338, 0.0
          %344 = vst.msk [vmem:[#allocation2 + $0x28] sm:$0xff] %vm338, 0.0
          %345 = vst.msk [vmem:[#allocation2 + $0x30] sm:$0xff] %vm338, 0.0
          %346 = vst.msk [vmem:[#allocation2 + $0x38] sm:$0xff] %vm338, 0.0
          %347 = vst.msk [vmem:[#allocation2 + $0x40] sm:$0xff] %vm338, 0.0
          %348 = vst.msk [vmem:[#allocation2 + $0x48] sm:$0xff] %vm338, 0.0
          %349 = vst.msk [vmem:[#allocation2 + $0x50] sm:$0xff] %vm338, 0.0
          %350 = vst.msk [vmem:[#allocation2 + $0x58] sm:$0xff] %vm338, 0.0
          %351 = vst.msk [vmem:[#allocation2 + $0x60] sm:$0xff] %vm338, 0.0
          %352 = vst.msk [vmem:[#allocation2 + $0x68] sm:$0xff] %vm338, 0.0
          %353 = vst.msk [vmem:[#allocation2 + $0x70] sm:$0xff] %vm338, 0.0
          %354 = vst.msk [vmem:[#allocation2 + $0x78] sm:$0xff] %vm338, 0.0
          %355 = vst.msk [vmem:[#allocation2 + $0x80] sm:$0xff] %vm338, 0.0
          %356 = vst.msk [vmem:[#allocation2 + $0x88] sm:$0xff] %vm338, 0.0
          %357 = vst.msk [vmem:[#allocation2 + $0x90] sm:$0xff] %vm338, 0.0
          %358 = vst.msk [vmem:[#allocation2 + $0x98] sm:$0xff] %vm338, 0.0
          %359 = vst.msk [vmem:[#allocation2 + $0xa0] sm:$0xff] %vm338, 0.0
          %360 = vst.msk [vmem:[#allocation2 + $0xa8] sm:$0xff] %vm338, 0.0
          %361 = vst.msk [vmem:[#allocation2 + $0xb0] sm:$0xff] %vm338, 0.0
          %362 = vst.msk [vmem:[#allocation2 + $0xb8] sm:$0xff] %vm338, 0.0
          %363 = vst.msk [vmem:[#allocation2 + $0xc0] sm:$0xff] %vm338, 0.0
          %364 = vst.msk [vmem:[#allocation2 + $0xc8] sm:$0xff] %vm338, 0.0
          %365 = vst.msk [vmem:[#allocation2 + $0xd0] sm:$0xff] %vm338, 0.0
          %366 = vst.msk [vmem:[#allocation2 + $0xd8] sm:$0xff] %vm338, 0.0
          %367 = vst.msk [vmem:[#allocation2 + $0xe0] sm:$0xff] %vm338, 0.0
          %368 = vst.msk [vmem:[#allocation2 + $0xe8] sm:$0xff] %vm338, 0.0
          %369 = vst.msk [vmem:[#allocation2 + $0xf0] sm:$0xff] %vm338, 0.0
          %370 = vst.msk [vmem:[#allocation2 + $0xf8] sm:$0xff] %vm338, 0.0
        $region48: #{tpu_custom_call.1} parent=39 // pred_fallthru
          _
        %v371 = vld [vmem:[%s310] sm:$0xff]
        %v372 = vld [vmem:[%s310 + $0x8] sm:$0xff]
        %v373 = vld [vmem:[%s310 + $0x10] sm:$0xff]
        %v374 = vld [vmem:[%s310 + $0x18] sm:$0xff]
        %v375 = vld [vmem:[%s310 + $0x20] sm:$0xff]
        %v376 = vld [vmem:[%s310 + $0x28] sm:$0xff]
        %v377 = vld [vmem:[%s310 + $0x30] sm:$0xff]
        %v378 = vld [vmem:[%s310 + $0x38] sm:$0xff]
        %v379 = vld [vmem:[%s310 + $0x40] sm:$0xff]
        %v380 = vld [vmem:[%s310 + $0x48] sm:$0xff]
        %v381 = vld [vmem:[%s310 + $0x50] sm:$0xff]
        %v382 = vld [vmem:[%s310 + $0x58] sm:$0xff]
        %v383 = vld [vmem:[%s310 + $0x60] sm:$0xff]
        %v384 = vld [vmem:[%s310 + $0x68] sm:$0xff]
        %v385 = vld [vmem:[%s310 + $0x70] sm:$0xff]
        %v386 = vld [vmem:[%s310 + $0x78] sm:$0xff]
        %v387 = vld [vmem:[%s310 + $0x80] sm:$0xff]
        %v388 = vld [vmem:[%s310 + $0x88] sm:$0xff]
        %v389 = vld [vmem:[%s310 + $0x90] sm:$0xff]
        %v390 = vld [vmem:[%s310 + $0x98] sm:$0xff]
        %v391 = vld [vmem:[%s310 + $0xa0] sm:$0xff]
        %v392 = vld [vmem:[%s310 + $0xa8] sm:$0xff]
        %v393 = vld [vmem:[%s310 + $0xb0] sm:$0xff]
        %v394 = vld [vmem:[%s310 + $0xb8] sm:$0xff]
        %v395 = vld [vmem:[%s310 + $0xc0] sm:$0xff]
        %v396 = vld [vmem:[%s310 + $0xc8] sm:$0xff]
        %v397 = vld [vmem:[%s310 + $0xd0] sm:$0xff]
        %v398 = vld [vmem:[%s310 + $0xd8] sm:$0xff]
        %v399 = vld [vmem:[%s310 + $0xe0] sm:$0xff]
        %v400 = vld [vmem:[%s310 + $0xe8] sm:$0xff]
        %v401 = vld [vmem:[%s310 + $0xf0] sm:$0xff]
        %v402 = vld [vmem:[%s310 + $0xf8] sm:$0xff]
        %s403 = sld [smem:[#allocation3]]
        %s404 = sld [smem:[#allocation3 + $0x1]]
        %v405 = vstv %s403
        %v406 = vmul.f32 %v371, %v405
        %v407 = vmul.f32 %v372, %v405
        %v408 = vmul.f32 %v373, %v405
        %v409 = vmul.f32 %v374, %v405
        %v410 = vmul.f32 %v375, %v405
        %v411 = vmul.f32 %v376, %v405
        %v412 = vmul.f32 %v377, %v405
        %v413 = vmul.f32 %v378, %v405
        %v414 = vmul.f32 %v379, %v405
        %v415 = vmul.f32 %v380, %v405
        %v416 = vmul.f32 %v381, %v405
        %v417 = vmul.f32 %v382, %v405
        %v418 = vmul.f32 %v383, %v405
        %v419 = vmul.f32 %v384, %v405
        %v420 = vmul.f32 %v385, %v405
        %v421 = vmul.f32 %v386, %v405
        %v422 = vmul.f32 %v387, %v405
        %v423 = vmul.f32 %v388, %v405
        %v424 = vmul.f32 %v389, %v405
        %v425 = vmul.f32 %v390, %v405
        %v426 = vmul.f32 %v391, %v405
        %v427 = vmul.f32 %v392, %v405
        %v428 = vmul.f32 %v393, %v405
        %v429 = vmul.f32 %v394, %v405
        %v430 = vmul.f32 %v395, %v405
        %v431 = vmul.f32 %v396, %v405
        %v432 = vmul.f32 %v397, %v405
        %v433 = vmul.f32 %v398, %v405
        %v434 = vmul.f32 %v399, %v405
        %v435 = vmul.f32 %v400, %v405
        %v436 = vmul.f32 %v401, %v405
        %v437 = vmul.f32 %v402, %v405
        %v438 = vround.ne.pseudo %v406
        %v439 = vround.ne.pseudo %v407
        %v440 = vround.ne.pseudo %v408
        %v441 = vround.ne.pseudo %v409
        %v442 = vround.ne.pseudo %v410
        %v443 = vround.ne.pseudo %v411
        %v444 = vround.ne.pseudo %v412
        %v445 = vround.ne.pseudo %v413
        %v446 = vround.ne.pseudo %v414
        %v447 = vround.ne.pseudo %v415
        %v448 = vround.ne.pseudo %v416
        %v449 = vround.ne.pseudo %v417
        %v450 = vround.ne.pseudo %v418
        %v451 = vround.ne.pseudo %v419
        %v452 = vround.ne.pseudo %v420
        %v453 = vround.ne.pseudo %v421
        %v454 = vround.ne.pseudo %v422
        %v455 = vround.ne.pseudo %v423
        %v456 = vround.ne.pseudo %v424
        %v457 = vround.ne.pseudo %v425
        %v458 = vround.ne.pseudo %v426
        %v459 = vround.ne.pseudo %v427
        %v460 = vround.ne.pseudo %v428
        %v461 = vround.ne.pseudo %v429
        %v462 = vround.ne.pseudo %v430
        %v463 = vround.ne.pseudo %v431
        %v464 = vround.ne.pseudo %v432
        %v465 = vround.ne.pseudo %v433
        %v466 = vround.ne.pseudo %v434
        %v467 = vround.ne.pseudo %v435
        %v468 = vround.ne.pseudo %v436
        %v469 = vround.ne.pseudo %v437
        %v470 = vstv %s404
        %v471 = vadd.f32 %v438, %v470
        %v472 = vadd.f32 %v439, %v470
        %v473 = vadd.f32 %v440, %v470
        %v474 = vadd.f32 %v441, %v470
        %v475 = vadd.f32 %v442, %v470
        %v476 = vadd.f32 %v443, %v470
        %v477 = vadd.f32 %v444, %v470
        %v478 = vadd.f32 %v445, %v470
        %v479 = vadd.f32 %v446, %v470
        %v480 = vadd.f32 %v447, %v470
        %v481 = vadd.f32 %v448, %v470
        %v482 = vadd.f32 %v449, %v470
        %v483 = vadd.f32 %v450, %v470
        %v484 = vadd.f32 %v451, %v470
        %v485 = vadd.f32 %v452, %v470
        %v486 = vadd.f32 %v453, %v470
        %v487 = vadd.f32 %v454, %v470
        %v488 = vadd.f32 %v455, %v470
        %v489 = vadd.f32 %v456, %v470
        %v490 = vadd.f32 %v457, %v470
        %v491 = vadd.f32 %v458, %v470
        %v492 = vadd.f32 %v459, %v470
        %v493 = vadd.f32 %v460, %v470
        %v494 = vadd.f32 %v461, %v470
        %v495 = vadd.f32 %v462, %v470
        %v496 = vadd.f32 %v463, %v470
        %v497 = vadd.f32 %v464, %v470
        %v498 = vadd.f32 %v465, %v470
        %v499 = vadd.f32 %v466, %v470
        %v500 = vadd.f32 %v467, %v470
        %v501 = vadd.f32 %v468, %v470
        %v502 = vadd.f32 %v469, %v470
        %v503 = vmax.f32 %v471, 0.0
        %v504 = vmax.f32 %v472, 0.0
        %v505 = vmax.f32 %v473, 0.0
        %v506 = vmax.f32 %v474, 0.0
        %v507 = vmax.f32 %v475, 0.0
        %v508 = vmax.f32 %v476, 0.0
        %v509 = vmax.f32 %v477, 0.0
        %v510 = vmax.f32 %v478, 0.0
        %v511 = vmax.f32 %v479, 0.0
        %v512 = vmax.f32 %v480, 0.0
        %v513 = vmax.f32 %v481, 0.0
        %v514 = vmax.f32 %v482, 0.0
        %v515 = vmax.f32 %v483, 0.0
        %v516 = vmax.f32 %v484, 0.0
        %v517 = vmax.f32 %v485, 0.0
        %v518 = vmax.f32 %v486, 0.0
        %v519 = vmax.f32 %v487, 0.0
        %v520 = vmax.f32 %v488, 0.0
        %v521 = vmax.f32 %v489, 0.0
        %v522 = vmax.f32 %v490, 0.0
        %v523 = vmax.f32 %v491, 0.0
        %v524 = vmax.f32 %v492, 0.0
        %v525 = vmax.f32 %v493, 0.0
        %v526 = vmax.f32 %v494, 0.0
        %v527 = vmax.f32 %v495, 0.0
        %v528 = vmax.f32 %v496, 0.0
        %v529 = vmax.f32 %v497, 0.0
        %v530 = vmax.f32 %v498, 0.0
        %v531 = vmax.f32 %v499, 0.0
        %v532 = vmax.f32 %v500, 0.0
        %v533 = vmax.f32 %v501, 0.0
        %v534 = vmax.f32 %v502, 0.0
        %v535 = vmin.f32 %v503, 255.0
        %v536 = vmin.f32 %v504, 255.0
        %v537 = vmin.f32 %v505, 255.0
        %v538 = vmin.f32 %v506, 255.0
        %v539 = vmin.f32 %v507, 255.0
        %v540 = vmin.f32 %v508, 255.0
        %v541 = vmin.f32 %v509, 255.0
        %v542 = vmin.f32 %v510, 255.0
        %v543 = vmin.f32 %v511, 255.0
        %v544 = vmin.f32 %v512, 255.0
        %v545 = vmin.f32 %v513, 255.0
        %v546 = vmin.f32 %v514, 255.0
        %v547 = vmin.f32 %v515, 255.0
        %v548 = vmin.f32 %v516, 255.0
        %v549 = vmin.f32 %v517, 255.0
        %v550 = vmin.f32 %v518, 255.0
        %v551 = vmin.f32 %v519, 255.0
        %v552 = vmin.f32 %v520, 255.0
        %v553 = vmin.f32 %v521, 255.0
        %v554 = vmin.f32 %v522, 255.0
        %v555 = vmin.f32 %v523, 255.0
        %v556 = vmin.f32 %v524, 255.0
        %v557 = vmin.f32 %v525, 255.0
        %v558 = vmin.f32 %v526, 255.0
        %v559 = vmin.f32 %v527, 255.0
        %v560 = vmin.f32 %v528, 255.0
        %v561 = vmin.f32 %v529, 255.0
        %v562 = vmin.f32 %v530, 255.0
        %v563 = vmin.f32 %v531, 255.0
        %v564 = vmin.f32 %v532, 255.0
        %v565 = vmin.f32 %v533, 255.0
        %v566 = vmin.f32 %v534, 255.0
        %v567 = vld [vmem:[#allocation2] sm:$0xff]
        %v568 = vld [vmem:[#allocation2 + $0x8] sm:$0xff]
        %v569 = vld [vmem:[#allocation2 + $0x10] sm:$0xff]
        %v570 = vld [vmem:[#allocation2 + $0x18] sm:$0xff]
        %v571 = vld [vmem:[#allocation2 + $0x20] sm:$0xff]
        %v572 = vld [vmem:[#allocation2 + $0x28] sm:$0xff]
        %v573 = vld [vmem:[#allocation2 + $0x30] sm:$0xff]
        %v574 = vld [vmem:[#allocation2 + $0x38] sm:$0xff]
        %v575 = vld [vmem:[#allocation2 + $0x40] sm:$0xff]
        %v576 = vld [vmem:[#allocation2 + $0x48] sm:$0xff]
        %v577 = vld [vmem:[#allocation2 + $0x50] sm:$0xff]
        %v578 = vld [vmem:[#allocation2 + $0x58] sm:$0xff]
        %v579 = vld [vmem:[#allocation2 + $0x60] sm:$0xff]
        %v580 = vld [vmem:[#allocation2 + $0x68] sm:$0xff]
        %v581 = vld [vmem:[#allocation2 + $0x70] sm:$0xff]
        %v582 = vld [vmem:[#allocation2 + $0x78] sm:$0xff]
        %v583 = vld [vmem:[#allocation2 + $0x80] sm:$0xff]
        %v584 = vld [vmem:[#allocation2 + $0x88] sm:$0xff]
        %v585 = vld [vmem:[#allocation2 + $0x90] sm:$0xff]
        %v586 = vld [vmem:[#allocation2 + $0x98] sm:$0xff]
        %v587 = vld [vmem:[#allocation2 + $0xa0] sm:$0xff]
        %v588 = vld [vmem:[#allocation2 + $0xa8] sm:$0xff]
        %v589 = vld [vmem:[#allocation2 + $0xb0] sm:$0xff]
        %v590 = vld [vmem:[#allocation2 + $0xb8] sm:$0xff]
        %v591 = vld [vmem:[#allocation2 + $0xc0] sm:$0xff]
        %v592 = vld [vmem:[#allocation2 + $0xc8] sm:$0xff]
        %v593 = vld [vmem:[#allocation2 + $0xd0] sm:$0xff]
        %v594 = vld [vmem:[#allocation2 + $0xd8] sm:$0xff]
        %v595 = vld [vmem:[#allocation2 + $0xe0] sm:$0xff]
        %v596 = vld [vmem:[#allocation2 + $0xe8] sm:$0xff]
        %v597 = vld [vmem:[#allocation2 + $0xf0] sm:$0xff]
        %v598 = vld [vmem:[#allocation2 + $0xf8] sm:$0xff]
        %v599 = vpack.c.bf16 %v536, %v535
        %v600 = vpack.c.bf16 %v538, %v537
        %v601 = vpack.c.bf16 %v540, %v539
        %v602 = vpack.c.bf16 %v542, %v541
        %v603 = vpack.c.bf16 %v544, %v543
        %v604 = vpack.c.bf16 %v546, %v545
        %v605 = vpack.c.bf16 %v548, %v547
        %v606 = vpack.c.bf16 %v550, %v549
        %v607 = vpack.c.bf16 %v552, %v551
        %v608 = vpack.c.bf16 %v554, %v553
        %v609 = vpack.c.bf16 %v556, %v555
        %v610 = vpack.c.bf16 %v558, %v557
        %v611 = vpack.c.bf16 %v560, %v559
        %v612 = vpack.c.bf16 %v562, %v561
        %v613 = vpack.c.bf16 %v564, %v563
        %v614 = vpack.c.bf16 %v566, %v565
        %v615 = vld [vmem:[%s317] sm:$0x1]
        %v616 = vunpack.c.l.s8.bf16 %v615
        %vm617 = vcmask 31744
        %v619 = vsel %vm617, %v599, 0
        %v622 = vsel %vm617, %v600, 0
        %v625 = vsel %vm617, %v601, 0
        %v628 = vsel %vm617, %v602, 0
        %v631 = vsel %vm617, %v603, 0
        %v634 = vsel %vm617, %v604, 0
        %v637 = vsel %vm617, %v605, 0
        %v640 = vsel %vm617, %v606, 0
        %v643 = vsel %vm617, %v607, 0
        %v646 = vsel %vm617, %v608, 0
        %v649 = vsel %vm617, %v609, 0
        %v652 = vsel %vm617, %v610, 0
        %v655 = vsel %vm617, %v611, 0
        %v658 = vsel %vm617, %v612, 0
        %v661 = vsel %vm617, %v613, 0
        %v664 = vsel %vm617, %v614, 0
        %vm666 = vcmask 1041408
        %v668 = vsel %vm666, %v616, 0
        %670 = vmatprep.subr.bf16.mxu0 0
        %671 = vmatpush1.bf16.msra.mxu0 0
        %672 = vmatprep.subr.bf16.mxu0 0
        %673 = vmatpush1.bf16.msra.mxu0 0
        %674 = vmatprep.subr.bf16.mxu0 0
        %675 = vmatpush1.bf16.msra.mxu0 0
        %676 = vmatprep.subr.bf16.mxu0 0
        %677 = vmatpush1.bf16.msra.mxu0 0
        %678 = vmatprep.subr.bf16.mxu0 0
        %679 = vmatpush1.bf16.msra.mxu0 0
        %680 = vmatprep.subr.bf16.mxu0 0
        %681 = vmatpush1.bf16.msra.mxu0 0
        %682 = vmatprep.subr.bf16.mxu0 0
        %683 = vmatpush1.bf16.msra.mxu0 0
        %684 = vmatprep.subr.bf16.mxu0 0
        %685 = vmatpush1.bf16.msra.mxu0 %v668
        %686 = vmatprep.subr.bf16.mxu0 0
        %687 = vmatpush2.bf16.msra.mxu0 0
        %688 = vmatprep.subr.bf16.mxu0 0
        %689 = vmatpush2.bf16.msra.mxu0 0
        %690 = vmatprep.subr.bf16.mxu0 0
        %691 = vmatpush2.bf16.msra.mxu0 0
        %692 = vmatprep.subr.bf16.mxu0 0
        %693 = vmatpush2.bf16.msra.mxu0 0
        %694 = vmatprep.subr.bf16.mxu0 0
        %695 = vmatpush2.bf16.msra.mxu0 0
        %696 = vmatprep.subr.bf16.mxu0 0
        %697 = vmatpush2.bf16.msra.mxu0 0
        %698 = vmatprep.subr.bf16.mxu0 0
        %699 = vmatpush2.bf16.msra.mxu0 0
        %700 = vmatprep.subr.bf16.mxu0 0
        %701 = vmatpush2.bf16.msra.mxu0 0
        %702 = vmatprep.mubr.bf16.mxu0 0
        %703 = vmatmul.mubr.bf16.gmra.mxu0 %v619
        %v704 = vpop.f32.mrf.mxu0
        %v705 = vadd.f32 0.0, %v704
        %v706 = vpop.f32.mrf.mxu0
        %v707 = vpop.f32.mrf.mxu0
        %v708 = vadd.f32 0.0, %v707
        %v709 = vpop.f32.mrf.mxu0
        %710 = vmatprep.mubr.bf16.mxu0 0
        %711 = vmatmul.mubr.bf16.gmra.mxu0 %v622
        %v712 = vpop.f32.mrf.mxu0
        %v713 = vadd.f32 0.0, %v712
        %v714 = vpop.f32.mrf.mxu0
        %v715 = vpop.f32.mrf.mxu0
        %v716 = vadd.f32 0.0, %v715
        %v717 = vpop.f32.mrf.mxu0
        %718 = vmatprep.mubr.bf16.mxu0 0
        %719 = vmatmul.mubr.bf16.gmra.mxu0 %v625
        %v720 = vpop.f32.mrf.mxu0
        %v721 = vadd.f32 0.0, %v720
        %v722 = vpop.f32.mrf.mxu0
        %v723 = vpop.f32.mrf.mxu0
        %v724 = vadd.f32 0.0, %v723
        %v725 = vpop.f32.mrf.mxu0
        %726 = vmatprep.mubr.bf16.mxu0 0
        %727 = vmatmul.mubr.bf16.gmra.mxu0 %v628
        %v728 = vpop.f32.mrf.mxu0
        %v729 = vadd.f32 0.0, %v728
        %v730 = vpop.f32.mrf.mxu0
        %v731 = vpop.f32.mrf.mxu0
        %v732 = vadd.f32 0.0, %v731
        %v733 = vpop.f32.mrf.mxu0
        %734 = vmatprep.mubr.bf16.mxu0 0
        %735 = vmatmul.mubr.bf16.gmra.mxu0 %v631
        %v736 = vpop.f32.mrf.mxu0
        %v737 = vadd.f32 0.0, %v736
        %v738 = vpop.f32.mrf.mxu0
        %v739 = vpop.f32.mrf.mxu0
        %v740 = vadd.f32 0.0, %v739
        %v741 = vpop.f32.mrf.mxu0
        %742 = vmatprep.mubr.bf16.mxu0 0
        %743 = vmatmul.mubr.bf16.gmra.mxu0 %v634
        %v744 = vpop.f32.mrf.mxu0
        %v745 = vadd.f32 0.0, %v744
        %v746 = vpop.f32.mrf.mxu0
        %v747 = vpop.f32.mrf.mxu0
        %v748 = vadd.f32 0.0, %v747
        %v749 = vpop.f32.mrf.mxu0
        %750 = vmatprep.mubr.bf16.mxu0 0
        %751 = vmatmul.mubr.bf16.gmra.mxu0 %v637
        %v752 = vpop.f32.mrf.mxu0
        %v753 = vadd.f32 0.0, %v752
        %v754 = vpop.f32.mrf.mxu0
        %v755 = vpop.f32.mrf.mxu0
        %v756 = vadd.f32 0.0, %v755
        %v757 = vpop.f32.mrf.mxu0
        %758 = vmatprep.mubr.bf16.mxu0 0
        %759 = vmatmul.mubr.bf16.gmra.mxu0 %v640
        %v760 = vpop.f32.mrf.mxu0
        %v761 = vadd.f32 0.0, %v760
        %v762 = vpop.f32.mrf.mxu0
        %v763 = vpop.f32.mrf.mxu0
        %v764 = vadd.f32 0.0, %v763
        %v765 = vpop.f32.mrf.mxu0
        %766 = vmatprep.mubr.bf16.mxu0 0
        %767 = vmatmul.mubr.bf16.gmra.mxu0 %v643
        %v768 = vpop.f32.mrf.mxu0
        %v769 = vadd.f32 0.0, %v768
        %v770 = vpop.f32.mrf.mxu0
        %v771 = vpop.f32.mrf.mxu0
        %v772 = vadd.f32 0.0, %v771
        %v773 = vpop.f32.mrf.mxu0
        %774 = vmatprep.mubr.bf16.mxu0 0
        %775 = vmatmul.mubr.bf16.gmra.mxu0 %v646
        %v776 = vpop.f32.mrf.mxu0
        %v777 = vadd.f32 0.0, %v776
        %v778 = vpop.f32.mrf.mxu0
        %v779 = vpop.f32.mrf.mxu0
        %v780 = vadd.f32 0.0, %v779
        %v781 = vpop.f32.mrf.mxu0
        %782 = vmatprep.mubr.bf16.mxu0 0
        %783 = vmatmul.mubr.bf16.gmra.mxu0 %v649
        %v784 = vpop.f32.mrf.mxu0
        %v785 = vadd.f32 0.0, %v784
        %v786 = vpop.f32.mrf.mxu0
        %v787 = vpop.f32.mrf.mxu0
        %v788 = vadd.f32 0.0, %v787
        %v789 = vpop.f32.mrf.mxu0
        %790 = vmatprep.mubr.bf16.mxu0 0
        %791 = vmatmul.mubr.bf16.gmra.mxu0 %v652
        %v792 = vpop.f32.mrf.mxu0
        %v793 = vadd.f32 0.0, %v792
        %v794 = vpop.f32.mrf.mxu0
        %v795 = vpop.f32.mrf.mxu0
        %v796 = vadd.f32 0.0, %v795
        %v797 = vpop.f32.mrf.mxu0
        %798 = vmatprep.mubr.bf16.mxu0 0
        %799 = vmatmul.mubr.bf16.gmra.mxu0 %v655
        %v800 = vpop.f32.mrf.mxu0
        %v801 = vadd.f32 0.0, %v800
        %v802 = vpop.f32.mrf.mxu0
        %v803 = vpop.f32.mrf.mxu0
        %v804 = vadd.f32 0.0, %v803
        %v805 = vpop.f32.mrf.mxu0
        %806 = vmatprep.mubr.bf16.mxu0 0
        %807 = vmatmul.mubr.bf16.gmra.mxu0 %v658
        %v808 = vpop.f32.mrf.mxu0
        %v809 = vadd.f32 0.0, %v808
        %v810 = vpop.f32.mrf.mxu0
        %v811 = vpop.f32.mrf.mxu0
        %v812 = vadd.f32 0.0, %v811
        %v813 = vpop.f32.mrf.mxu0
        %814 = vmatprep.mubr.bf16.mxu0 0
        %815 = vmatmul.mubr.bf16.gmra.mxu0 %v661
        %v816 = vpop.f32.mrf.mxu0
        %v817 = vadd.f32 0.0, %v816
        %v818 = vpop.f32.mrf.mxu0
        %v819 = vpop.f32.mrf.mxu0
        %v820 = vadd.f32 0.0, %v819
        %v821 = vpop.f32.mrf.mxu0
        %822 = vmatprep.mubr.bf16.mxu0 0
        %823 = vmatmul.mubr.bf16.gmra.mxu0 %v664
        %v824 = vpop.f32.mrf.mxu0
        %v825 = vadd.f32 0.0, %v824
        %v826 = vpop.f32.mrf.mxu0
        %v827 = vpop.f32.mrf.mxu0
        %v828 = vadd.f32 0.0, %v827
        %v829 = vpop.f32.mrf.mxu0
        %830 = vdwg.mxu0
        %v831 = vadd.f32 %v567, %v705
        %v832 = vadd.f32 %v568, %v708
        %v833 = vadd.f32 %v569, %v713
        %v834 = vadd.f32 %v570, %v716
        %v835 = vadd.f32 %v571, %v721
        %v836 = vadd.f32 %v572, %v724
        %v837 = vadd.f32 %v573, %v729
        %v838 = vadd.f32 %v574, %v732
        %v839 = vadd.f32 %v575, %v737
        %v840 = vadd.f32 %v576, %v740
        %v841 = vadd.f32 %v577, %v745
        %v842 = vadd.f32 %v578, %v748
        %v843 = vadd.f32 %v579, %v753
        %v844 = vadd.f32 %v580, %v756
        %v845 = vadd.f32 %v581, %v761
        %v846 = vadd.f32 %v582, %v764
        %v847 = vadd.f32 %v583, %v769
        %v848 = vadd.f32 %v584, %v772
        %v849 = vadd.f32 %v585, %v777
        %v850 = vadd.f32 %v586, %v780
        %v851 = vadd.f32 %v587, %v785
        %v852 = vadd.f32 %v588, %v788
        %v853 = vadd.f32 %v589, %v793
        %v854 = vadd.f32 %v590, %v796
        %v855 = vadd.f32 %v591, %v801
        %v856 = vadd.f32 %v592, %v804
        %v857 = vadd.f32 %v593, %v809
        %v858 = vadd.f32 %v594, %v812
        %v859 = vadd.f32 %v595, %v817
        %v860 = vadd.f32 %v596, %v820
        %v861 = vadd.f32 %v597, %v825
        %v862 = vadd.f32 %v598, %v828
        %vm863 = vcmask 261120
        %864 = vst.msk [vmem:[#allocation2] sm:$0xff] %vm863, %v831
        %865 = vst.msk [vmem:[#allocation2 + $0x8] sm:$0xff] %vm863, %v832
        %866 = vst.msk [vmem:[#allocation2 + $0x10] sm:$0xff] %vm863, %v833
        %867 = vst.msk [vmem:[#allocation2 + $0x18] sm:$0xff] %vm863, %v834
        %868 = vst.msk [vmem:[#allocation2 + $0x20] sm:$0xff] %vm863, %v835
        %869 = vst.msk [vmem:[#allocation2 + $0x28] sm:$0xff] %vm863, %v836
        %870 = vst.msk [vmem:[#allocation2 + $0x30] sm:$0xff] %vm863, %v837
        %871 = vst.msk [vmem:[#allocation2 + $0x38] sm:$0xff] %vm863, %v838
        %872 = vst.msk [vmem:[#allocation2 + $0x40] sm:$0xff] %vm863, %v839
        %873 = vst.msk [vmem:[#allocation2 + $0x48] sm:$0xff] %vm863, %v840
        %874 = vst.msk [vmem:[#allocation2 + $0x50] sm:$0xff] %vm863, %v841
        %875 = vst.msk [vmem:[#allocation2 + $0x58] sm:$0xff] %vm863, %v842
        %876 = vst.msk [vmem:[#allocation2 + $0x60] sm:$0xff] %vm863, %v843
        %877 = vst.msk [vmem:[#allocation2 + $0x68] sm:$0xff] %vm863, %v844
        %878 = vst.msk [vmem:[#allocation2 + $0x70] sm:$0xff] %vm863, %v845
        %879 = vst.msk [vmem:[#allocation2 + $0x78] sm:$0xff] %vm863, %v846
        %880 = vst.msk [vmem:[#allocation2 + $0x80] sm:$0xff] %vm863, %v847
        %881 = vst.msk [vmem:[#allocation2 + $0x88] sm:$0xff] %vm863, %v848
        %882 = vst.msk [vmem:[#allocation2 + $0x90] sm:$0xff] %vm863, %v849
        %883 = vst.msk [vmem:[#allocation2 + $0x98] sm:$0xff] %vm863, %v850
        %884 = vst.msk [vmem:[#allocation2 + $0xa0] sm:$0xff] %vm863, %v851
        %885 = vst.msk [vmem:[#allocation2 + $0xa8] sm:$0xff] %vm863, %v852
        %886 = vst.msk [vmem:[#allocation2 + $0xb0] sm:$0xff] %vm863, %v853
        %887 = vst.msk [vmem:[#allocation2 + $0xb8] sm:$0xff] %vm863, %v854
        %888 = vst.msk [vmem:[#allocation2 + $0xc0] sm:$0xff] %vm863, %v855
        %889 = vst.msk [vmem:[#allocation2 + $0xc8] sm:$0xff] %vm863, %v856
        %890 = vst.msk [vmem:[#allocation2 + $0xd0] sm:$0xff] %vm863, %v857
        %891 = vst.msk [vmem:[#allocation2 + $0xd8] sm:$0xff] %vm863, %v858
        %892 = vst.msk [vmem:[#allocation2 + $0xe0] sm:$0xff] %vm863, %v859
        %893 = vst.msk [vmem:[#allocation2 + $0xe8] sm:$0xff] %vm863, %v860
        %894 = vst.msk [vmem:[#allocation2 + $0xf0] sm:$0xff] %vm863, %v861
        %895 = vst.msk [vmem:[#allocation2 + $0xf8] sm:$0xff] %vm863, %v862
        // Predicated region
        $region49: #{tpu_custom_call.1} parent=39 // pred_check
          %p896 = pneg %p334
        $region50: #{tpu_custom_call.1} parent=39 // pred_check_branch
          %898 = sbr.rel (%p896) target = $region52
        $region51: #{tpu_custom_call.1} parent=39 // pred_region
          %s899 = sld [smem:[#allocation3 + $0x2]]
          %v900 = vld [vmem:[#allocation2] sm:$0xff]
          %v901 = vld [vmem:[#allocation2 + $0x8] sm:$0xff]
          %v902 = vld [vmem:[#allocation2 + $0x10] sm:$0xff]
          %v903 = vld [vmem:[#allocation2 + $0x18] sm:$0xff]
          %v904 = vld [vmem:[#allocation2 + $0x20] sm:$0xff]
          %v905 = vld [vmem:[#allocation2 + $0x28] sm:$0xff]
          %v906 = vld [vmem:[#allocation2 + $0x30] sm:$0xff]
          %v907 = vld [vmem:[#allocation2 + $0x38] sm:$0xff]
          %v908 = vld [vmem:[#allocation2 + $0x40] sm:$0xff]
          %v909 = vld [vmem:[#allocation2 + $0x48] sm:$0xff]
          %v910 = vld [vmem:[#allocation2 + $0x50] sm:$0xff]
          %v911 = vld [vmem:[#allocation2 + $0x58] sm:$0xff]
          %v912 = vld [vmem:[#allocation2 + $0x60] sm:$0xff]
          %v913 = vld [vmem:[#allocation2 + $0x68] sm:$0xff]
          %v914 = vld [vmem:[#allocation2 + $0x70] sm:$0xff]
          %v915 = vld [vmem:[#allocation2 + $0x78] sm:$0xff]
          %v916 = vld [vmem:[#allocation2 + $0x80] sm:$0xff]
          %v917 = vld [vmem:[#allocation2 + $0x88] sm:$0xff]
          %v918 = vld [vmem:[#allocation2 + $0x90] sm:$0xff]
          %v919 = vld [vmem:[#allocation2 + $0x98] sm:$0xff]
          %v920 = vld [vmem:[#allocation2 + $0xa0] sm:$0xff]
          %v921 = vld [vmem:[#allocation2 + $0xa8] sm:$0xff]
          %v922 = vld [vmem:[#allocation2 + $0xb0] sm:$0xff]
          %v923 = vld [vmem:[#allocation2 + $0xb8] sm:$0xff]
          %v924 = vld [vmem:[#allocation2 + $0xc0] sm:$0xff]
          %v925 = vld [vmem:[#allocation2 + $0xc8] sm:$0xff]
          %v926 = vld [vmem:[#allocation2 + $0xd0] sm:$0xff]
          %v927 = vld [vmem:[#allocation2 + $0xd8] sm:$0xff]
          %v928 = vld [vmem:[#allocation2 + $0xe0] sm:$0xff]
          %v929 = vld [vmem:[#allocation2 + $0xe8] sm:$0xff]
          %v930 = vld [vmem:[#allocation2 + $0xf0] sm:$0xff]
          %v931 = vld [vmem:[#allocation2 + $0xf8] sm:$0xff]
          %v932 = vld [vmem:[%s323] sm:$0x1]
          %v933 = vmul.f32 %v470, %v932
          %v935 = vlaneseq
          %v936 = vshrl.u32 %v935, 7
          %v937 = vsub.s32 0, %v936
          %v938 = vrot.slane %v933, %v937
          %v940 = vsub.f32 %v900, %v938
          %v941 = vsub.f32 %v901, %v938
          %v942 = vsub.f32 %v902, %v938
          %v943 = vsub.f32 %v903, %v938
          %v944 = vsub.f32 %v904, %v938
          %v945 = vsub.f32 %v905, %v938
          %v946 = vsub.f32 %v906, %v938
          %v947 = vsub.f32 %v907, %v938
          %v948 = vsub.f32 %v908, %v938
          %v949 = vsub.f32 %v909, %v938
          %v950 = vsub.f32 %v910, %v938
          %v951 = vsub.f32 %v911, %v938
          %v952 = vsub.f32 %v912, %v938
          %v953 = vsub.f32 %v913, %v938
          %v954 = vsub.f32 %v914, %v938
          %v955 = vsub.f32 %v915, %v938
          %v956 = vsub.f32 %v916, %v938
          %v957 = vsub.f32 %v917, %v938
          %v958 = vsub.f32 %v918, %v938
          %v959 = vsub.f32 %v919, %v938
          %v960 = vsub.f32 %v920, %v938
          %v961 = vsub.f32 %v921, %v938
          %v962 = vsub.f32 %v922, %v938
          %v963 = vsub.f32 %v923, %v938
          %v964 = vsub.f32 %v924, %v938
          %v965 = vsub.f32 %v925, %v938
          %v966 = vsub.f32 %v926, %v938
          %v967 = vsub.f32 %v927, %v938
          %v968 = vsub.f32 %v928, %v938
          %v969 = vsub.f32 %v929, %v938
          %v970 = vsub.f32 %v930, %v938
          %v971 = vsub.f32 %v931, %v938
          %v972 = vstv %s899
          %v973 = vmul.f32 %v940, %v972
          %v974 = vmul.f32 %v941, %v972
          %v975 = vmul.f32 %v942, %v972
          %v976 = vmul.f32 %v943, %v972
          %v977 = vmul.f32 %v944, %v972
          %v978 = vmul.f32 %v945, %v972
          %v979 = vmul.f32 %v946, %v972
          %v980 = vmul.f32 %v947, %v972
          %v981 = vmul.f32 %v948, %v972
          %v982 = vmul.f32 %v949, %v972
          %v983 = vmul.f32 %v950, %v972
          %v984 = vmul.f32 %v951, %v972
          %v985 = vmul.f32 %v952, %v972
          %v986 = vmul.f32 %v953, %v972
          %v987 = vmul.f32 %v954, %v972
          %v988 = vmul.f32 %v955, %v972
          %v989 = vmul.f32 %v956, %v972
          %v990 = vmul.f32 %v957, %v972
          %v991 = vmul.f32 %v958, %v972
          %v992 = vmul.f32 %v959, %v972
          %v993 = vmul.f32 %v960, %v972
          %v994 = vmul.f32 %v961, %v972
          %v995 = vmul.f32 %v962, %v972
          %v996 = vmul.f32 %v963, %v972
          %v997 = vmul.f32 %v964, %v972
          %v998 = vmul.f32 %v965, %v972
          %v999 = vmul.f32 %v966, %v972
          %v1000 = vmul.f32 %v967, %v972
          %v1001 = vmul.f32 %v968, %v972
          %v1002 = vmul.f32 %v969, %v972
          %v1003 = vmul.f32 %v970, %v972
          %v1004 = vmul.f32 %v971, %v972
          %v1005 = vld [vmem:[%s320] sm:$0x1]
          %v1007 = vlaneseq
          %v1008 = vshrl.u32 %v1007, 7
          %v1009 = vsub.s32 0, %v1008
          %v1010 = vrot.slane %v1005, %v1009
          %v1012 = vadd.f32 %v973, %v1010
          %v1013 = vadd.f32 %v974, %v1010
          %v1014 = vadd.f32 %v975, %v1010
          %v1015 = vadd.f32 %v976, %v1010
          %v1016 = vadd.f32 %v977, %v1010
          %v1017 = vadd.f32 %v978, %v1010
          %v1018 = vadd.f32 %v979, %v1010
          %v1019 = vadd.f32 %v980, %v1010
          %v1020 = vadd.f32 %v981, %v1010
          %v1021 = vadd.f32 %v982, %v1010
          %v1022 = vadd.f32 %v983, %v1010
          %v1023 = vadd.f32 %v984, %v1010
          %v1024 = vadd.f32 %v985, %v1010
          %v1025 = vadd.f32 %v986, %v1010
          %v1026 = vadd.f32 %v987, %v1010
          %v1027 = vadd.f32 %v988, %v1010
          %v1028 = vadd.f32 %v989, %v1010
          %v1029 = vadd.f32 %v990, %v1010
          %v1030 = vadd.f32 %v991, %v1010
          %v1031 = vadd.f32 %v992, %v1010
          %v1032 = vadd.f32 %v993, %v1010
          %v1033 = vadd.f32 %v994, %v1010
          %v1034 = vadd.f32 %v995, %v1010
          %v1035 = vadd.f32 %v996, %v1010
          %v1036 = vadd.f32 %v997, %v1010
          %v1037 = vadd.f32 %v998, %v1010
          %v1038 = vadd.f32 %v999, %v1010
          %v1039 = vadd.f32 %v1000, %v1010
          %v1040 = vadd.f32 %v1001, %v1010
          %v1041 = vadd.f32 %v1002, %v1010
          %v1042 = vadd.f32 %v1003, %v1010
          %v1043 = vadd.f32 %v1004, %v1010
          %1044 = vst.msk [vmem:[%s331] sm:$0xff] %vm863, %v1012
          %1045 = vst.msk [vmem:[%s331 + $0x8] sm:$0xff] %vm863, %v1013
          %1046 = vst.msk [vmem:[%s331 + $0x10] sm:$0xff] %vm863, %v1014
          %1047 = vst.msk [vmem:[%s331 + $0x18] sm:$0xff] %vm863, %v1015
          %1048 = vst.msk [vmem:[%s331 + $0x20] sm:$0xff] %vm863, %v1016
          %1049 = vst.msk [vmem:[%s331 + $0x28] sm:$0xff] %vm863, %v1017
          %1050 = vst.msk [vmem:[%s331 + $0x30] sm:$0xff] %vm863, %v1018
          %1051 = vst.msk [vmem:[%s331 + $0x38] sm:$0xff] %vm863, %v1019
          %1052 = vst.msk [vmem:[%s331 + $0x40] sm:$0xff] %vm863, %v1020
          %1053 = vst.msk [vmem:[%s331 + $0x48] sm:$0xff] %vm863, %v1021
          %1054 = vst.msk [vmem:[%s331 + $0x50] sm:$0xff] %vm863, %v1022
          %1055 = vst.msk [vmem:[%s331 + $0x58] sm:$0xff] %vm863, %v1023
          %1056 = vst.msk [vmem:[%s331 + $0x60] sm:$0xff] %vm863, %v1024
          %1057 = vst.msk [vmem:[%s331 + $0x68] sm:$0xff] %vm863, %v1025
          %1058 = vst.msk [vmem:[%s331 + $0x70] sm:$0xff] %vm863, %v1026
          %1059 = vst.msk [vmem:[%s331 + $0x78] sm:$0xff] %vm863, %v1027
          %1060 = vst.msk [vmem:[%s331 + $0x80] sm:$0xff] %vm863, %v1028
          %1061 = vst.msk [vmem:[%s331 + $0x88] sm:$0xff] %vm863, %v1029
          %1062 = vst.msk [vmem:[%s331 + $0x90] sm:$0xff] %vm863, %v1030
          %1063 = vst.msk [vmem:[%s331 + $0x98] sm:$0xff] %vm863, %v1031
          %1064 = vst.msk [vmem:[%s331 + $0xa0] sm:$0xff] %vm863, %v1032
          %1065 = vst.msk [vmem:[%s331 + $0xa8] sm:$0xff] %vm863, %v1033
          %1066 = vst.msk [vmem:[%s331 + $0xb0] sm:$0xff] %vm863, %v1034
          %1067 = vst.msk [vmem:[%s331 + $0xb8] sm:$0xff] %vm863, %v1035
          %1068 = vst.msk [vmem:[%s331 + $0xc0] sm:$0xff] %vm863, %v1036
          %1069 = vst.msk [vmem:[%s331 + $0xc8] sm:$0xff] %vm863, %v1037
          %1070 = vst.msk [vmem:[%s331 + $0xd0] sm:$0xff] %vm863, %v1038
          %1071 = vst.msk [vmem:[%s331 + $0xd8] sm:$0xff] %vm863, %v1039
          %1072 = vst.msk [vmem:[%s331 + $0xe0] sm:$0xff] %vm863, %v1040
          %1073 = vst.msk [vmem:[%s331 + $0xe8] sm:$0xff] %vm863, %v1041
          %1074 = vst.msk [vmem:[%s331 + $0xf0] sm:$0xff] %vm863, %v1042
          %1075 = vst.msk [vmem:[%s331 + $0xf8] sm:$0xff] %vm863, %v1043
        $region52: #{tpu_custom_call.1} parent=39 // pred_fallthru
          _
        %s1076 = smul.u32 32, %s22
        %p1077 = scmp.lt.s32.totalorder %s1076, 63
        %s1078 = scalar_select %p1077, %s1076, 63
        %p1079 = scmp.lt.s32.totalorder %s23, 0
        %s1080 = scalar_select %p1079, %s23, 0
        %s1081 = sadd.s32 %s1080, %s1078
        %s1082 = smul.addr %s1081, 8
        %s1083 = scalar_lea.vmem %s5, %s1082
        // Predicated region
        $region53: #{tpu_custom_call.1} parent=39 // pred_check
          %p1084 = pneg %p185
        $region54: #{tpu_custom_call.1} parent=39 // pred_check_branch
          %1086 = sbr.rel (%p1084) target = $region56
        $region55: #{tpu_custom_call.1} parent=39 // pred_region
          %s1087 = smul.u32 32, %s22
        $region56: #{tpu_custom_call.1} parent=39 // pred_fallthru
          _
      $region40: #{tpu_custom_call.1} parent=5 // pred_fallthru
        _
      %p1088 = scmp.le.s32.totalorder 2, %s12
      // Predicated region
      $region57: #{tpu_custom_call.1} parent=5 // pred_check
        %p1089 = pneg %p1088
      $region58: #{tpu_custom_call.1} parent=5 // pred_check_branch
        %1091 = sbr.rel (%p1089) target = $region60
      $region59: #{tpu_custom_call.1} parent=5 // pred_region
        %s1092 = ssub.s32 %s12, 2
        // Predicated region
        $region61: #{tpu_custom_call.1} parent=59 // pred_check
          %p1093 = pneg %p191
        $region62: #{tpu_custom_call.1} parent=59 // pred_check_branch
          %1095 = sbr.rel (%p1093) target = $region64
        $region63: #{tpu_custom_call.1} parent=59 // pred_region
          %s1096 = smul.u32 32, %s25
          %p1097 = scmp.lt.s32.totalorder %s1096, 63
          %s1098 = scalar_select %p1097, %s1096, 63
          %p1099 = scmp.lt.s32.totalorder %s26, 0
          %s1100 = scalar_select %p1099, %s26, 0
          %s1101 = sadd.s32 %s1100, %s1098
          %s1102 = smul.addr %s1101, 8
          %s1103 = scalar_lea.vmem %s5, %s1102
        $region64: #{tpu_custom_call.1} parent=59 // pred_fallthru
          _
      $region60: #{tpu_custom_call.1} parent=5 // pred_fallthru
        _
    $region6: #{tpu_custom_call.1} parent=1 // loop_footer
      %s16 = sadd.s32 1, %s12
    $region7: #{tpu_custom_call.1} parent=1 // loop_footer_branch
      %11 = sbr.rel target = $region3
    $region8: #{tpu_custom_call.1} parent=1 // loop_exit
      _
    %1104 = vsyncpa [#allocation4], 1
    %s1105 = scalar_lea.sflag [#allocation4], 1
    %1106 = vsyncpa %s1105, 1

</llo_original>
